<compile_context>
chip_gen: v5e
topology: v5e:2x2
jax: 0.10.0
libtpu: 0.0.40
codegen_flags: <defaults>
</compile_context>

<pallas_src>
import functools

import jax
import jax.numpy as jnp
from jax.experimental import pallas as pl
from jax.experimental.pallas import tpu as pltpu


def _apply_power(y, power: float):
    """Static (Python-time) dispatch on the exponent."""
    if power == 1.0:
        return y
    p = float(power)
    if p.is_integer() and 2.0 <= p <= 16.0:
        # Square-and-multiply on the VPU: ~log2(p) multiplies instead of p-1,
        # and no exp/log traffic through the single EUP slot.
        exp = int(p)
        base = y
        result = None
        while exp > 0:
            if exp & 1:
                result = base if result is None else result * base
            exp >>= 1
            if exp:
                base = base * base
        return result
    # Generic (non-integer / out-of-range) power: compute in f32 for accuracy.
    return (y.astype(jnp.float32) ** jnp.float32(p)).astype(y.dtype)


def _triangle_kernel(x_ref, o_ref, *, power: float, inv_c: float):
    # x_ref / o_ref: (tile_n, C, tile_hw) block.  The channel axis (=1) is
    # complete inside every block, so the mean needs no cross-tile reduction.
    x = x_ref[...]
    # f32 accumulation for the channel sum; explicit static 1/C multiply.
    mean_c = jnp.sum(x.astype(jnp.float32), axis=1, keepdims=True) * jnp.float32(inv_c)
    if x.dtype == jnp.float32:
        y = jnp.maximum(x - mean_c, 0.0)
    else:
        # Keep elementwise work in the narrower input dtype (helps v6e/v7x;
        # neutral on v5e which widens to f32 in the VALU anyway).
        y = jnp.maximum(x - mean_c.astype(x.dtype), jnp.zeros((), x.dtype))
    y = _apply_power(y, power)
    o_ref[...] = y.astype(o_ref.dtype)


def _round_up(v: int, m: int) -> int:
    return -(-v // m) * m


def _pick_vmem_limit() -> int:
    """Scoped-VMEM limit per generation (conservative fallback if unknown)."""
    default = 40 << 20  # safe on v7x (64 MiB physical), fine elsewhere
    try:
        info = pltpu.get_tpu_info()
        phys = getattr(info, "vmem_capacity_bytes", None)
        if phys is None:
            return default
        phys = int(phys)
        if phys >= (100 << 20):      # v5e / v6e: 128 MiB physical
            return 64 << 20
        return min(default, (phys * 3) // 5)
    except Exception:
        return default


def _choose_tiles(n: int, c: int, hw: int, dtype, vmem_limit: int):
    """Pick (tile_n, tile_hw): lane-dense, sublane-padding-aware, VMEM-safe,
    and with >= 2 grid programs whenever the input is splittable (v7x megacore).
    """
    itemsize = jnp.dtype(dtype).itemsize
    sublane = max(8, 32 // max(itemsize, 1))        # 8 (f32), 16 (bf16), 32 (int8)
    padded_c = _round_up(c, sublane)                # real sublane footprint of C

    # Per-block budget: in + out, each double-buffered -> 4 live blocks, plus
    # headroom for compiler scratch.
    budget = min(8 << 20, max(vmem_limit // 5, 1 << 20))

    if hw <= 128:
        # Sub-128-lane spatial extent: the only legal block width is the full
        # dim.  (Stores become masked vst.msk; acceptable for tiny shapes.)
        tile_hw = hw
    else:
        bytes_per_n_full = padded_c * _round_up(hw, 128) * itemsize
        if bytes_per_n_full <= budget:
            tile_hw = hw                            # full spatial extent
        else:
            max_hw = budget // max(padded_c * itemsize, 1)
            max_hw_128 = max((max_hw // 128) * 128, 128)
            # Prefer a 128-multiple that evenly divides hw (no ragged last
            # block, even grid extents); fall back to the largest 128-multiple.
            tile_hw = 0
            d = max_hw_128
            while d >= 128:
                if hw % d == 0:
                    tile_hw = d
                    break
                d -= 128
            if tile_hw == 0:
                tile_hw = max_hw_128
            # TODO(synk): for extreme C (padded_c * 128 * itemsize > budget) a
            # channel-split grid axis with a pl.when-managed f32 partial-sum
            # accumulator would be needed; here we accept the minimal block.

    padded_hw = tile_hw if tile_hw == hw else _round_up(tile_hw, 128)
    bytes_per_n = max(padded_c * _round_up(padded_hw, 128) * itemsize, 1)
    tile_n = max(1, min(n, budget // bytes_per_n))

    # v7x megacore: guarantee >= 2 programs on a 'parallel' axis when possible.
    if pl.cdiv(n, tile_n) * pl.cdiv(hw, tile_hw) < 2:
        if tile_n >= 2:
            tile_n = (tile_n + 1) // 2
        elif tile_hw == hw and hw % 256 == 0:
            tile_hw = hw // 2                       # still a multiple of 128
        elif tile_hw > 128 and tile_hw % 256 == 0:
            tile_hw //= 2
        # else: input too small to split; a single program is fine.

    return tile_n, tile_hw


@functools.partial(jax.jit, static_argnames=("power",))
def triangle(x: jax.Array, power: float = 1.0) -> jax.Array:
    """Pallas TPU version of Triangle.forward. x is NCHW."""
    n, c, h, w = x.shape
    hw = h * w
    x2 = x.reshape(n, c, hw)  # lane-dense layout; contiguous, so this is free

    vmem_limit = _pick_vmem_limit()
    tile_n, tile_hw = _choose_tiles(n, c, hw, x.dtype, vmem_limit)
    grid = (pl.cdiv(n, tile_n), pl.cdiv(hw, tile_hw))

    kernel = functools.partial(_triangle_kernel, power=power, inv_c=1.0 / c)
    out = pl.pallas_call(
        kernel,
        out_shape=jax.ShapeDtypeStruct((n, c, hw), x.dtype),
        grid_spec=pltpu.PrefetchScalarGridSpec(
            num_scalar_prefetch=0,
            grid=grid,
            in_specs=[pl.BlockSpec((tile_n, c, tile_hw), lambda i, j: (i, 0, j))],
            out_specs=pl.BlockSpec((tile_n, c, tile_hw), lambda i, j: (i, 0, j)),
        ),
        compiler_params=pltpu.CompilerParams(
            dimension_semantics=("parallel", "parallel"),
            vmem_limit_bytes=vmem_limit,
        ),
    )(x2)
    return out.reshape(n, c, h, w)


def _triangle_ref(x: jax.Array, power: float = 1.0) -> jax.Array:
    """Pure-JAX reference matching the PyTorch semantics."""
    mean_c = jnp.mean(x, axis=1, keepdims=True)
    return jnp.maximum(x - mean_c, 0.0) ** power


if __name__ == "__main__":
    key = jax.random.PRNGKey(0)
    # Small NCHW input: batch=2, channels=4, spatial=16x16
    x = jax.random.normal(key, (2, 4, 16, 16), dtype=jnp.float32)

    ok = True
    for power in (1.0, 2.0, 4.0, 2.5):
        out = triangle(x, power=power)
        out = jax.block_until_ready(out)
        ref = _triangle_ref(x, power=power)
        ok &= out.shape == ref.shape and out.dtype == ref.dtype
        ok &= bool(jnp.allclose(out, ref, atol=1e-5, rtol=1e-5))
    assert ok, "mismatch vs reference"

    print("KERNEL_OK")
</pallas_src>

<mosaic_0001>
module attributes {stable_mosaic.version = 11 : i64} {
  func.func @_triangle_kernel(%arg0: i32, %arg1: i32, %arg2: memref<1x4x256xf32, #tpu.memory_space<vmem>>, %arg3: memref<1x4x256xf32, #tpu.memory_space<vmem>>) attributes {dimension_semantics = [#tpu.dimension_semantics<parallel>, #tpu.dimension_semantics<parallel>], iteration_bounds = array<i64: 2, 1>, scalar_prefetch = 0 : i64, scratch_operands = 0 : i64, tpu.core_type = #tpu.core_type<tc>, window_params = [{transform_indices = @transform_0, window_bounds = array<i64: 1, 4, 256>}, {transform_indices = @transform_1, window_bounds = array<i64: 1, 4, 256>}]} {
    %c0 = arith.constant 0 : index
    %c0_0 = arith.constant 0 : index
    %c0_1 = arith.constant 0 : index
    %0 = vector.load %arg2[%c0, %c0_0, %c0_1] : memref<1x4x256xf32, #tpu.memory_space<vmem>>, vector<1x4x256xf32>
    %cst = arith.constant dense<0.000000e+00> : vector<1x256xf32>
    %1 = vector.multi_reduction <add>, %0, %cst [1] : vector<1x4x256xf32> to vector<1x256xf32>
    %2 = vector.shape_cast %1 : vector<1x256xf32> to vector<1x1x256xf32>
    %cst_2 = arith.constant 2.500000e-01 : f32
    %3 = vector.broadcast %cst_2 : f32 to vector<1x1x256xf32>
    %4 = arith.mulf %2, %3 : vector<1x1x256xf32>
    %5 = vector.broadcast %4 : vector<1x1x256xf32> to vector<1x4x256xf32>
    %6 = arith.subf %0, %5 : vector<1x4x256xf32>
    %cst_3 = arith.constant 0.000000e+00 : f32
    %7 = vector.broadcast %cst_3 : f32 to vector<1x4x256xf32>
    %8 = arith.maximumf %6, %7 : vector<1x4x256xf32>
    %c0_4 = arith.constant 0 : index
    %c0_5 = arith.constant 0 : index
    %c0_6 = arith.constant 0 : index
    %9 = vector.load %arg3[%c0_4, %c0_5, %c0_6] : memref<1x4x256xf32, #tpu.memory_space<vmem>>, vector<1x4x256xf32>
    tpu.vector_store %arg3[%c0_4, %c0_5, %c0_6], %8 {strides = array<i32>} : memref<1x4x256xf32, #tpu.memory_space<vmem>>, vector<1x4x256xf32>,
    return
  }
  func.func @transform_0(%arg0: i32, %arg1: i32) -> (i32, i32, i32) {
    %c0_i32 = arith.constant 0 : i32
    %c0_i32_0 = arith.constant 0 : i32
    return %arg0, %c0_i32, %arg1 : i32, i32, i32
  }
  func.func @transform_1(%arg0: i32, %arg1: i32) -> (i32, i32, i32) {
    %c0_i32 = arith.constant 0 : i32
    %c0_i32_0 = arith.constant 0 : i32
    return %arg0, %c0_i32, %arg1 : i32, i32, i32
  }
}

</mosaic_0001>

<llo_original>
// kernel: triangle.1
$region0: #{triangle.1}
  #allocation0 [shape = 'u32[]', space=smem, size = 0x4, offset = 0x4, fixed_abs, tag = 'smem constant byte address 0x4 - core index']
  #allocation1 [shape = 'u32[72,128]{1,0:T(1,128)}', space=vmem, size = 0x9000, scoped, tag = 'internal scratch']
  %s0 = inlined_call_operand.vmem [shape: f32[2,4,256], index: 0, kind: input, shape index: {}]
  %s1 = inlined_call_operand.vmem [shape: f32[2,4,256], index: 1, kind: output, shape index: {}]
  %s2 = sld [smem:[#allocation0]]
  $region37: #{triangle.1} parent=0
    _
  %s4 = ssub.s32 1, %s2
  %s5 = scalar_select 0, %s4, %s2
  loop: start=0, step=1, limit=4
  $region2: #{triangle.1} parent=0 // loop_pre_header
    _
  $region3: #{triangle.1} parent=0 // loop_header
    %s7 = sphi 0, %s11
    %p8 = scmp.ge.s32.totalorder %s7, 4
    %s14 = sphi 0, %s26
    %s15 = sphi 0, %s22
    %s16 = sphi 0, %s14
    %s17 = sphi 0, %s15
    %s18 = sphi 0, %s16
    %s19 = sphi 0, %s17
    %s31 = sphi 0, %s33
    %s34 = sphi 0, %s31
    %s35 = sphi 0, %s34
    %s51 = sphi 0, %s35
    %s59 = sphi 0, %s61
    %s62 = sphi 0, %s59
    %s63 = sphi 0, %s62
    %s79 = sphi 0, %s63
  $region4: #{triangle.1} parent=0 // loop_header_branch
    %10 = sbr.rel (%p8) target = $region8
  $region5: #{triangle.1} parent=0 // loop_body
    %s12 = ssub.s32 %s7, 1
    %s13 = ssub.s32 %s7, 2
    %s20 = sadd.s32 1, %s15
    %p21 = scmp.ge.s32.totalorder %s20, 1
    %s22 = scalar_select %p21, 0, %s20
    %s23 = sadd.s32 1, %s14
    %s24 = scalar_select %p21, %s23, %s14
    %p25 = scmp.ge.s32.totalorder %s24, 2
    %s26 = scalar_select %p25, 0, %s24
    %s27 = ssub.s32 %s14, %s26
    %s28 = ssub.s32 %s15, %s22
    %s29 = sor.u32 %s27, %s28
    %p30 = scmp.eq.s32.totalorder %s29, 0
    %s32 = sadd.s32 %s31, 1
    %s33 = scalar_select %p30, %s31, %s32
    %p36 = pneg %p30
    %p37 = scmp.eq.s32.totalorder %s7, 1
    %p38 = por %p36, %p37
    %p39 = scmp.ne.s32.totalorder %s31, %s34
    %p40 = scmp.eq.s32.totalorder %s7, 0
    %p41 = por %p39, %p40
    %p42 = scmp.ne.s32.totalorder %s31, %s34
    %p43 = scmp.eq.s32.totalorder %s12, 1
    %p44 = por %p42, %p43
    %p45 = scmp.ne.s32.totalorder %s34, %s35
    %p46 = scmp.eq.s32.totalorder %s12, 0
    %p47 = por %p45, %p46
    %p48 = scmp.ne.s32.totalorder %s34, %s35
    %p49 = scmp.eq.s32.totalorder %s13, 1
    %p50 = por %p48, %p49
    %p52 = scmp.ne.s32.totalorder %s35, %s51
    %p53 = scmp.eq.s32.totalorder %s13, 0
    %p54 = por %p52, %p53
    %s55 = ssub.s32 %s14, %s26
    %s56 = ssub.s32 %s15, %s22
    %s57 = sor.u32 %s55, %s56
    %p58 = scmp.eq.s32.totalorder %s57, 0
    %s60 = sadd.s32 %s59, 1
    %s61 = scalar_select %p58, %s59, %s60
    %p64 = pneg %p58
    %p65 = scmp.eq.s32.totalorder %s7, 1
    %p66 = por %p64, %p65
    %p67 = scmp.ne.s32.totalorder %s59, %s62
    %p68 = scmp.eq.s32.totalorder %s7, 0
    %p69 = por %p67, %p68
    %p70 = scmp.ne.s32.totalorder %s59, %s62
    %p71 = scmp.eq.s32.totalorder %s12, 1
    %p72 = por %p70, %p71
    %p73 = scmp.ne.s32.totalorder %s62, %s63
    %p74 = scmp.eq.s32.totalorder %s12, 0
    %p75 = por %p73, %p74
    %p76 = scmp.ne.s32.totalorder %s62, %s63
    %p77 = scmp.eq.s32.totalorder %s13, 1
    %p78 = por %p76, %p77
    %p80 = scmp.ne.s32.totalorder %s63, %s79
    %p81 = scmp.eq.s32.totalorder %s13, 0
    %p82 = por %p80, %p81
    %p83 = scmp.le.s32.totalorder 1, %s7
    %p84 = scmp.lt.s32.totalorder %s7, 3
    %p85 = pnand %p83, %p84
    %p86 = pneg %p85
    // Predicated region
    $region9: #{triangle.1} parent=5 // pred_check
      _
    $region10: #{triangle.1} parent=5 // pred_check_branch
      %88 = sbr.rel (%p85) target = $region12
    $region11: #{triangle.1} parent=5 // pred_region
      %s89 = ssub.s32 %s7, 1
    $region12: #{triangle.1} parent=5 // pred_fallthru
      _
    %p90 = scmp.lt.s32.totalorder %s7, 2
    // Predicated region
    $region13: #{triangle.1} parent=5 // pred_check
      %p91 = pneg %p90
    $region14: #{triangle.1} parent=5 // pred_check_branch
      %93 = sbr.rel (%p91) target = $region16
    $region15: #{triangle.1} parent=5 // pred_region
      // Predicated region
      $region17: #{triangle.1} parent=15 // pred_check
        %p94 = pneg %p41
      $region18: #{triangle.1} parent=15 // pred_check_branch
        %96 = sbr.rel (%p94) target = $region20
      $region19: #{triangle.1} parent=15 // pred_region
        %s97 = smul.u32 2, %s15
        %p98 = scmp.lt.s32.totalorder %s14, 1
        %s99 = scalar_select %p98, %s14, 1
        %p100 = scmp.lt.s32.totalorder %s97, 1
        %s101 = scalar_select %p100, %s97, 1
        %s102 = smul.addr %s99, 2
        %s103 = sadd.s32 %s101, %s102
        %s104 = smul.addr %s103, 4
        %s105 = scalar_lea.vmem %s0, %s104
        %s106 = smul.u32 2, %s15
      $region20: #{triangle.1} parent=15 // pred_fallthru
        _
    $region16: #{triangle.1} parent=5 // pred_fallthru
      _
    %p107 = scmp.le.s32.totalorder 1, %s7
    %p108 = scmp.lt.s32.totalorder %s7, 3
    %p109 = pnand %p107, %p108
    %p110 = pneg %p109
    // Predicated region
    $region21: #{triangle.1} parent=5 // pred_check
      _
    $region22: #{triangle.1} parent=5 // pred_check_branch
      %112 = sbr.rel (%p109) target = $region24
    $region23: #{triangle.1} parent=5 // pred_region
      %s113 = ssub.s32 %s7, 1
      %s114 = smul.u32 2, %s17
      %p115 = scmp.lt.s32.totalorder %s16, 1
      %s116 = scalar_select %p115, %s16, 1
      %p117 = scmp.lt.s32.totalorder %s114, 1
      %s118 = scalar_select %p117, %s114, 1
      %s119 = smul.addr %s116, 2
      %s120 = sadd.s32 %s118, %s119
      %s121 = smul.addr %s120, 4
      %s122 = scalar_lea.vmem %s0, %s121
      %p123 = pneg %p47
      %p124 = pneg %p44
      %p125 = pneg %p75
      %p126 = pneg %p72
      %s127 = smul.u32 2, %s17
      %p128 = scmp.lt.s32.totalorder %s16, 1
      %s129 = scalar_select %p128, %s16, 1
      %p130 = scmp.lt.s32.totalorder %s127, 1
      %s131 = scalar_select %p130, %s127, 1
      %s132 = smul.addr %s129, 2
      %s133 = sadd.s32 %s131, %s132
      %s134 = smul.addr %s133, 4
      %s135 = scalar_lea.vmem %s1, %s134
      %s136 = smul.u32 2, %s17
      %p137 = scmp.lt.s32.totalorder %s16, 1
      %s138 = scalar_select %p137, %s16, 1
      %p139 = scmp.lt.s32.totalorder %s136, 1
      %s140 = scalar_select %p139, %s136, 1
      %s141 = smul.addr %s138, 2
      %s142 = sadd.s32 %s140, %s141
      %s143 = smul.addr %s142, 4
      %s144 = scalar_lea.vmem %s0, %s143
      %s145 = smul.u32 2, %s17
      %s146 = smul.u32 2, %s17
      %p147 = scmp.lt.s32.totalorder %s16, 1
      %s148 = scalar_select %p147, %s16, 1
      %p149 = scmp.lt.s32.totalorder %s146, 1
      %s150 = scalar_select %p149, %s146, 1
      %s151 = smul.addr %s148, 2
      %s152 = sadd.s32 %s150, %s151
      %s153 = smul.addr %s152, 4
      %s154 = scalar_lea.vmem %s1, %s153
      %s155 = smul.u32 2, %s17
      %v156 = vld [vmem:[%s144] sm:$0xff]
      %158 = vst [vmem:[#allocation1] ss:$2 sm:$0xff] %v156
      %v159 = vld.sshfl [vmem:[#allocation1] sm:$0xff pattern:$0x75316420]
      %v160 = vld.sshfl [vmem:[#allocation1 + $0x8] sm:$0xff pattern:$0x75316420]
      %vm163 = vcmask 1043456
      %v164 = vsel %vm163, %v159, 0.0
      %v165 = vrot.slane %v164, 4
      %v166 = vadd.f32 %v164, %v165
      %v167 = vrot.slane %v166, 2
      %v168 = vadd.f32 %v166, %v167
      %v169 = vrot.slane %v168, 1
      %v170 = vadd.f32 %v168, %v169
      %v171 = vsel %vm163, %v160, 0.0
      %v172 = vrot.slane %v171, 4
      %v173 = vadd.f32 %v171, %v172
      %v174 = vrot.slane %v173, 2
      %v175 = vadd.f32 %v173, %v174
      %v176 = vrot.slane %v175, 1
      %v177 = vadd.f32 %v175, %v176
      %v178 = vmul.f32 %v170, 0.25
      %v179 = vmul.f32 %v177, 0.25
      %v182 = vrot.slane %v179, 4
      %v183 = vsel %vm163, %v178, %v182
      %v185 = vsub.f32 %v156, %v183
      %v186 = vmax.f32 %v185, 0.0
      %187 = vst [vmem:[%s154] sm:$0xff] %v186
      %s188 = smul.u32 2, %s17
      %p189 = scmp.lt.s32.totalorder %s16, 1
      %s190 = scalar_select %p189, %s16, 1
      %p191 = scmp.lt.s32.totalorder %s188, 1
      %s192 = scalar_select %p191, %s188, 1
      %s193 = smul.addr %s190, 2
      %s194 = sadd.s32 %s192, %s193
      %s195 = smul.addr %s194, 4
      %s196 = scalar_lea.vmem %s1, %s195
      // Predicated region
      $region25: #{triangle.1} parent=23 // pred_check
        %p197 = pneg %p72
      $region26: #{triangle.1} parent=23 // pred_check_branch
        %199 = sbr.rel (%p197) target = $region28
      $region27: #{triangle.1} parent=23 // pred_region
        %s200 = smul.u32 2, %s17
      $region28: #{triangle.1} parent=23 // pred_fallthru
        _
    $region24: #{triangle.1} parent=5 // pred_fallthru
      _
    %p201 = scmp.le.s32.totalorder 2, %s7
    // Predicated region
    $region29: #{triangle.1} parent=5 // pred_check
      %p202 = pneg %p201
    $region30: #{triangle.1} parent=5 // pred_check_branch
      %204 = sbr.rel (%p202) target = $region32
    $region31: #{triangle.1} parent=5 // pred_region
      %s205 = ssub.s32 %s7, 2
      // Predicated region
      $region33: #{triangle.1} parent=31 // pred_check
        %p206 = pneg %p78
      $region34: #{triangle.1} parent=31 // pred_check_branch
        %208 = sbr.rel (%p206) target = $region36
      $region35: #{triangle.1} parent=31 // pred_region
        %s209 = smul.u32 2, %s19
        %p210 = scmp.lt.s32.totalorder %s18, 1
        %s211 = scalar_select %p210, %s18, 1
        %p212 = scmp.lt.s32.totalorder %s209, 1
        %s213 = scalar_select %p212, %s209, 1
        %s214 = smul.addr %s211, 2
        %s215 = sadd.s32 %s213, %s214
        %s216 = smul.addr %s215, 4
        %s217 = scalar_lea.vmem %s1, %s216
      $region36: #{triangle.1} parent=31 // pred_fallthru
        _
    $region32: #{triangle.1} parent=5 // pred_fallthru
      _
  $region6: #{triangle.1} parent=0 // loop_footer
    %s11 = sadd.s32 1, %s7
  $region7: #{triangle.1} parent=0 // loop_footer_branch
    %6 = sbr.rel target = $region3
  $region8: #{triangle.1} parent=0 // loop_exit
    _

</llo_original>
